<compile_context>
chip_gen: v7x
topology: tpu7x:2x2x1
jax: 0.10.0
libtpu: 0.0.40
codegen_flags: <defaults>
</compile_context>

<pallas_src>
import jax
import jax.numpy as jnp
from jax.experimental import pallas as pl
from jax.experimental.pallas import tpu as pltpu


MARGIN = 1.0


def _round_up(x: int, m: int) -> int:
    return ((x + m - 1) // m) * m


def _pick_tile_b(batch: int, d: int, itemsize: int) -> int:
    """Largest batch tile such that 6 double-buffered (tile_b, D) input streams
    stay well within the v7x scoped-VMEM budget (safe on v5e/v6e too)."""
    budget = 8 * 1024 * 1024          # ~1/4 of v7x's 32 MiB default scope
    per_row = 6 * 2 * d * itemsize    # 6 streams, double-buffered
    tb = (budget // max(per_row, 1)) // 8 * 8
    tb = max(8, min(512, tb))
    return min(tb, _round_up(batch, 8))


def _atth_fused_kernel(hp_ref, rp_ref, tp_ref, hn_ref, rn_ref, tn_ref,
                       w_ref, base_ref, out_ref):
    """Per batch tile: hinge = max(0, ||d_pos|| - ||d_neg|| + margin), with
    d = h * softmax(Linear([h, r, hyperplane])) + r - t."""
    d = hp_ref.shape[1]
    w_h = w_ref[0:d, :]          # head slab of W^T (resident in VMEM)
    w_r = w_ref[d:2 * d, :]      # relation slab of W^T
    base = base_ref[...]         # (1, D) f32: hyperplane @ W_hyp^T + bias (hoisted)

    def l2_row(h_ref, r_ref, t_ref):
        h = h_ref[...]
        r = r_ref[...]
        t = t_ref[...]
        # Accumulate the two remaining matmuls into the hoisted base term (f32).
        logits = base + jnp.dot(h, w_h, preferred_element_type=jnp.float32)
        logits = logits + jnp.dot(r, w_r, preferred_element_type=jnp.float32)
        # Softmax over the embedding dim; division goes to the EUP (approx recip).
        m = jnp.max(logits, axis=-1, keepdims=True)
        e = jnp.exp(logits - m)
        attn = e * pl.reciprocal(jnp.sum(e, axis=-1, keepdims=True), approx=True)
        diff = (h.astype(jnp.float32) * attn
                + r.astype(jnp.float32) - t.astype(jnp.float32))
        # Transpose before the reduce so the result lands lane-dense (1, TB);
        # the XLU transpose slot is otherwise idle in this kernel.
        sq_t = jnp.transpose(diff * diff)                      # (D, TB)
        return jnp.sqrt(jnp.sum(sq_t, axis=0, keepdims=True))  # (1, TB)

    norm_pos = l2_row(hp_ref, rp_ref, tp_ref)
    norm_neg = l2_row(hn_ref, rn_ref, tn_ref)
    # score = -norm; MarginRankingLoss(target=1, margin=1):
    #   max(0, neg_score - pos_score + margin) = max(0, norm_pos - norm_neg + m)
    out_ref[...] = jnp.maximum(norm_pos - norm_neg + MARGIN, 0.0)


def atth_forward(params, pos_triplets, neg_triplets):
    ent = params["entity_embeddings"]        # [E, D]  (bf16)
    rel = params["relation_embeddings"]      # [R, D]  (bf16)
    w_t = params["attention_wT"]             # [3D, D] (bf16) == W^T
    hyp = params["hyperplane"]               # [D]     (f32)
    bias = params["attention_b"]             # [D]     (f32)

    d = ent.shape[1]
    batch = pos_triplets.shape[0]
    tile_b = _pick_tile_b(batch, d, jnp.dtype(ent.dtype).itemsize)
    num_tiles = pl.cdiv(batch, tile_b)
    b_pad = num_tiles * tile_b

    def gather(triplets):
        # Embedding gather stays in plain JAX glue.
        # TODO(synk): fuse the gather into the kernel (scalar-prefetched index
        # columns + per-row DMA) to drop the extra HBM round trip of the
        # gathered [B, D] streams.
        heads, rels, tails = triplets[:, 0], triplets[:, 1], triplets[:, 2]
        if b_pad > batch:
            pad = (0, b_pad - batch)
            heads = jnp.pad(heads, pad)
            rels = jnp.pad(rels, pad)
            tails = jnp.pad(tails, pad)
        return (jnp.take(ent, heads, axis=0),
                jnp.take(rel, rels, axis=0),
                jnp.take(ent, tails, axis=0))

    hp, rp, tp = gather(pos_triplets)
    hn, rn, tn = gather(neg_triplets)

    # Loop-invariant hoist: hyperplane slab of the Linear plus bias, once, f32.
    w_hyp = w_t[2 * d:3 * d].astype(jnp.float32)            # [D, D]
    hyp_base = (hyp.astype(jnp.float32) @ w_hyp
                + bias.astype(jnp.float32)).reshape(1, d)   # [1, D] f32
    w2 = w_t[:2 * d]                                        # [2D, D] bf16

    emb_spec = pl.BlockSpec((tile_b, d), lambda i: (i, 0))

    hinge = pl.pallas_call(
        _atth_fused_kernel,
        out_shape=jax.ShapeDtypeStruct((num_tiles, 1, tile_b), jnp.float32),
        grid=(num_tiles,),
        in_specs=[emb_spec] * 6 + [
            pl.BlockSpec((2 * d, d), lambda i: (0, 0)),     # W^T slabs, resident
            pl.BlockSpec((1, d), lambda i: (0, 0)),         # hyp_base, resident
        ],
        out_specs=pl.BlockSpec((None, 1, tile_b), lambda i: (i, 0, 0)),
        compiler_params=pltpu.CompilerParams(
            dimension_semantics=("parallel",)),
    )(hp, rp, tp, hn, rn, tn, w2, hyp_base)

    # Final mean over the valid (un-padded) rows — tiny scalar glue.
    hinge = hinge.reshape(-1)[:batch]
    return jnp.sum(hinge) / batch


def atth_forward_ref(params, pos_triplets, neg_triplets):
    """Pure-JAX reference of the PyTorch forward (for validation only)."""
    ent = params["entity_embeddings"].astype(jnp.float32)
    rel = params["relation_embeddings"].astype(jnp.float32)
    w_t = params["attention_wT"].astype(jnp.float32)
    hyp = params["hyperplane"].astype(jnp.float32)
    bias = params["attention_b"].astype(jnp.float32)

    def score(triplets):
        h = ent[triplets[:, 0]]
        r = rel[triplets[:, 1]]
        t = ent[triplets[:, 2]]
        combined = jnp.concatenate(
            [h, r, jnp.broadcast_to(hyp, h.shape)], axis=-1)
        attn = jax.nn.softmax(combined @ w_t + bias, axis=-1)
        return -jnp.linalg.norm(h * attn + r - t, axis=1)

    pos_s = score(pos_triplets)
    neg_s = score(neg_triplets)
    return jnp.mean(jnp.maximum(neg_s - pos_s + MARGIN, 0.0))


def init_params(key, num_entities, num_relations, embedding_dim,
                emb_dtype=jnp.bfloat16):
    bound = 6.0 / embedding_dim ** 0.5
    lin_bound = 1.0 / (3 * embedding_dim) ** 0.5   # nn.Linear default-ish
    k = jax.random.split(key, 5)
    return {
        # bf16 storage halves HBM/VMEM traffic for the streamed operands and
        # uses the bf16 MXU path; post-matmul math in the kernel stays f32.
        "entity_embeddings": jax.random.uniform(
            k[0], (num_entities, embedding_dim), jnp.float32,
            -bound, bound).astype(emb_dtype),
        "relation_embeddings": jax.random.uniform(
            k[1], (num_relations, embedding_dim), jnp.float32,
            -bound, bound).astype(emb_dtype),
        "hyperplane": jax.random.uniform(
            k[2], (embedding_dim,), jnp.float32, -bound, bound),
        # Stored transposed: [3D, D] so the kernel computes x @ W^T directly.
        "attention_wT": jax.random.uniform(
            k[3], (3 * embedding_dim, embedding_dim), jnp.float32,
            -lin_bound, lin_bound).astype(emb_dtype),
        "attention_b": jax.random.uniform(
            k[4], (embedding_dim,), jnp.float32, -lin_bound, lin_bound),
    }


if __name__ == "__main__":
    num_entities, num_relations, embedding_dim = 20, 5, 32
    batch = 8

    key = jax.random.PRNGKey(0)
    kp, kt1, kt2, kt3 = jax.random.split(key, 4)
    params = init_params(kp, num_entities, num_relations, embedding_dim)

    pos_triplets = jnp.stack(
        [jax.random.randint(kt1, (batch,), 0, num_entities),
         jax.random.randint(kt2, (batch,), 0, num_relations),
         jax.random.randint(kt3, (batch,), 0, num_entities)],
        axis=1).astype(jnp.int32)
    neg_triplets = jnp.stack(
        [pos_triplets[:, 0],
         pos_triplets[:, 1],
         (pos_triplets[:, 2] + 7) % num_entities],
        axis=1).astype(jnp.int32)

    loss = jax.jit(atth_forward)(params, pos_triplets, neg_triplets)
    jax.block_until_ready(loss)

    ref = atth_forward_ref(params, pos_triplets, neg_triplets)
    assert loss.shape == () and bool(jnp.isfinite(loss))
    assert jnp.allclose(loss, ref, rtol=2e-2, atol=2e-2), (loss, ref)
    print("KERNEL_OK")
</pallas_src>

<mosaic_0001>
module attributes {stable_mosaic.version = 11 : i64} {
  func.func @_atth_fused_kernel(%arg0: i32, %arg1: memref<8x32xbf16, #tpu.memory_space<vmem>>, %arg2: memref<8x32xbf16, #tpu.memory_space<vmem>>, %arg3: memref<8x32xbf16, #tpu.memory_space<vmem>>, %arg4: memref<8x32xbf16, #tpu.memory_space<vmem>>, %arg5: memref<8x32xbf16, #tpu.memory_space<vmem>>, %arg6: memref<8x32xbf16, #tpu.memory_space<vmem>>, %arg7: memref<64x32xbf16, #tpu.memory_space<vmem>>, %arg8: memref<1x32xf32, #tpu.memory_space<vmem>>, %arg9: memref<1x1x8xf32, #tpu.memory_space<vmem>>) attributes {dimension_semantics = [#tpu.dimension_semantics<parallel>], iteration_bounds = array<i64: 1>, scalar_prefetch = 0 : i64, scratch_operands = 0 : i64, tpu.core_type = #tpu.core_type<tc>, window_params = [{transform_indices = @transform_0, window_bounds = array<i64: 8, 32>}, {transform_indices = @transform_1, window_bounds = array<i64: 8, 32>}, {transform_indices = @transform_2, window_bounds = array<i64: 8, 32>}, {transform_indices = @transform_3, window_bounds = array<i64: 8, 32>}, {transform_indices = @transform_4, window_bounds = array<i64: 8, 32>}, {transform_indices = @transform_5, window_bounds = array<i64: 8, 32>}, {pipeline_mode = #tpu.pipeline_mode<synchronous>, transform_indices = @transform_6, window_bounds = array<i64: 64, 32>}, {pipeline_mode = #tpu.pipeline_mode<synchronous>, transform_indices = @transform_7, window_bounds = array<i64: 1, 32>}, {transform_indices = @transform_8, window_bounds = array<i64: 1, 1, 8>}]} {
    %c0 = arith.constant 0 : index
    %c0_0 = arith.constant 0 : index
    %0 = vector.load %arg7[%c0, %c0_0] : memref<64x32xbf16, #tpu.memory_space<vmem>>, vector<32x32xbf16>
    %c32 = arith.constant 32 : index
    %c0_1 = arith.constant 0 : index
    %1 = vector.load %arg7[%c32, %c0_1] : memref<64x32xbf16, #tpu.memory_space<vmem>>, vector<32x32xbf16>
    %c0_2 = arith.constant 0 : index
    %c0_3 = arith.constant 0 : index
    %2 = vector.load %arg8[%c0_2, %c0_3] : memref<1x32xf32, #tpu.memory_space<vmem>>, vector<1x32xf32>
    %c0_4 = arith.constant 0 : index
    %c0_5 = arith.constant 0 : index
    %3 = vector.load %arg1[%c0_4, %c0_5] : memref<8x32xbf16, #tpu.memory_space<vmem>>, vector<8x32xbf16>
    %c0_6 = arith.constant 0 : index
    %c0_7 = arith.constant 0 : index
    %4 = vector.load %arg2[%c0_6, %c0_7] : memref<8x32xbf16, #tpu.memory_space<vmem>>, vector<8x32xbf16>
    %c0_8 = arith.constant 0 : index
    %c0_9 = arith.constant 0 : index
    %5 = vector.load %arg3[%c0_8, %c0_9] : memref<8x32xbf16, #tpu.memory_space<vmem>>, vector<8x32xbf16>
    %cst = arith.constant dense<0.000000e+00> : vector<8x32xf32>
    %6 = tpu.matmul %3, %0, %cst {dimension_numbers = #tpu.dot_dimension_numbers<[1], [0], [0], [1], [0, 0, 1, 1], [], []>} : vector<8x32xbf16>, vector<32x32xbf16>, vector<8x32xf32> -> vector<8x32xf32>
    %7 = vector.broadcast %2 : vector<1x32xf32> to vector<8x32xf32>
    %8 = arith.addf %7, %6 : vector<8x32xf32>
    %cst_10 = arith.constant dense<0.000000e+00> : vector<8x32xf32>
    %9 = tpu.matmul %4, %1, %cst_10 {dimension_numbers = #tpu.dot_dimension_numbers<[1], [0], [0], [1], [0, 0, 1, 1], [], []>} : vector<8x32xbf16>, vector<32x32xbf16>, vector<8x32xf32> -> vector<8x32xf32>
    %10 = arith.addf %8, %9 : vector<8x32xf32>
    %cst_11 = arith.constant dense<0xFF800000> : vector<8xf32>
    %11 = vector.multi_reduction <maximumf>, %10, %cst_11 [1] : vector<8x32xf32> to vector<8xf32>
    %12 = vector.shape_cast %11 : vector<8xf32> to vector<8x1xf32>
    %13 = vector.broadcast %12 : vector<8x1xf32> to vector<8x32xf32>
    %14 = arith.subf %10, %13 : vector<8x32xf32>
    %15 = math.exp %14 : vector<8x32xf32>
    %cst_12 = arith.constant dense<0.000000e+00> : vector<8xf32>
    %16 = vector.multi_reduction <add>, %15, %cst_12 [1] : vector<8x32xf32> to vector<8xf32>
    %17 = vector.shape_cast %16 : vector<8xf32> to vector<8x1xf32>
    %18 = tpu.reciprocal %17 {approx = true} : vector<8x1xf32> -> vector<8x1xf32>
    %19 = vector.broadcast %18 : vector<8x1xf32> to vector<8x32xf32>
    %20 = arith.mulf %15, %19 : vector<8x32xf32>
    %21 = arith.extf %3 : vector<8x32xbf16> to vector<8x32xf32>
    %22 = arith.mulf %21, %20 : vector<8x32xf32>
    %23 = arith.extf %4 : vector<8x32xbf16> to vector<8x32xf32>
    %24 = arith.addf %22, %23 : vector<8x32xf32>
    %25 = arith.extf %5 : vector<8x32xbf16> to vector<8x32xf32>
    %26 = arith.subf %24, %25 : vector<8x32xf32>
    %27 = arith.mulf %26, %26 : vector<8x32xf32>
    %28 = tpu.transpose %27, [1, 0] : vector<8x32xf32> -> vector<32x8xf32>
    %cst_13 = arith.constant dense<0.000000e+00> : vector<8xf32>
    %29 = vector.multi_reduction <add>, %28, %cst_13 [0] : vector<32x8xf32> to vector<8xf32>
    %30 = vector.shape_cast %29 : vector<8xf32> to vector<1x8xf32>
    %31 = math.sqrt %30 : vector<1x8xf32>
    %c0_14 = arith.constant 0 : index
    %c0_15 = arith.constant 0 : index
    %32 = vector.load %arg4[%c0_14, %c0_15] : memref<8x32xbf16, #tpu.memory_space<vmem>>, vector<8x32xbf16>
    %c0_16 = arith.constant 0 : index
    %c0_17 = arith.constant 0 : index
    %33 = vector.load %arg5[%c0_16, %c0_17] : memref<8x32xbf16, #tpu.memory_space<vmem>>, vector<8x32xbf16>
    %c0_18 = arith.constant 0 : index
    %c0_19 = arith.constant 0 : index
    %34 = vector.load %arg6[%c0_18, %c0_19] : memref<8x32xbf16, #tpu.memory_space<vmem>>, vector<8x32xbf16>
    %cst_20 = arith.constant dense<0.000000e+00> : vector<8x32xf32>
    %35 = tpu.matmul %32, %0, %cst_20 {dimension_numbers = #tpu.dot_dimension_numbers<[1], [0], [0], [1], [0, 0, 1, 1], [], []>} : vector<8x32xbf16>, vector<32x32xbf16>, vector<8x32xf32> -> vector<8x32xf32>
    %36 = vector.broadcast %2 : vector<1x32xf32> to vector<8x32xf32>
    %37 = arith.addf %36, %35 : vector<8x32xf32>
    %cst_21 = arith.constant dense<0.000000e+00> : vector<8x32xf32>
    %38 = tpu.matmul %33, %1, %cst_21 {dimension_numbers = #tpu.dot_dimension_numbers<[1], [0], [0], [1], [0, 0, 1, 1], [], []>} : vector<8x32xbf16>, vector<32x32xbf16>, vector<8x32xf32> -> vector<8x32xf32>
    %39 = arith.addf %37, %38 : vector<8x32xf32>
    %cst_22 = arith.constant dense<0xFF800000> : vector<8xf32>
    %40 = vector.multi_reduction <maximumf>, %39, %cst_22 [1] : vector<8x32xf32> to vector<8xf32>
    %41 = vector.shape_cast %40 : vector<8xf32> to vector<8x1xf32>
    %42 = vector.broadcast %41 : vector<8x1xf32> to vector<8x32xf32>
    %43 = arith.subf %39, %42 : vector<8x32xf32>
    %44 = math.exp %43 : vector<8x32xf32>
    %cst_23 = arith.constant dense<0.000000e+00> : vector<8xf32>
    %45 = vector.multi_reduction <add>, %44, %cst_23 [1] : vector<8x32xf32> to vector<8xf32>
    %46 = vector.shape_cast %45 : vector<8xf32> to vector<8x1xf32>
    %47 = tpu.reciprocal %46 {approx = true} : vector<8x1xf32> -> vector<8x1xf32>
    %48 = vector.broadcast %47 : vector<8x1xf32> to vector<8x32xf32>
    %49 = arith.mulf %44, %48 : vector<8x32xf32>
    %50 = arith.extf %32 : vector<8x32xbf16> to vector<8x32xf32>
    %51 = arith.mulf %50, %49 : vector<8x32xf32>
    %52 = arith.extf %33 : vector<8x32xbf16> to vector<8x32xf32>
    %53 = arith.addf %51, %52 : vector<8x32xf32>
    %54 = arith.extf %34 : vector<8x32xbf16> to vector<8x32xf32>
    %55 = arith.subf %53, %54 : vector<8x32xf32>
    %56 = arith.mulf %55, %55 : vector<8x32xf32>
    %57 = tpu.transpose %56, [1, 0] : vector<8x32xf32> -> vector<32x8xf32>
    %cst_24 = arith.constant dense<0.000000e+00> : vector<8xf32>
    %58 = vector.multi_reduction <add>, %57, %cst_24 [0] : vector<32x8xf32> to vector<8xf32>
    %59 = vector.shape_cast %58 : vector<8xf32> to vector<1x8xf32>
    %60 = math.sqrt %59 : vector<1x8xf32>
    %61 = arith.subf %31, %60 : vector<1x8xf32>
    %cst_25 = arith.constant 1.000000e+00 : f32
    %62 = vector.broadcast %cst_25 : f32 to vector<1x8xf32>
    %63 = arith.addf %61, %62 : vector<1x8xf32>
    %cst_26 = arith.constant 0.000000e+00 : f32
    %64 = vector.broadcast %cst_26 : f32 to vector<1x8xf32>
    %65 = arith.maximumf %63, %64 : vector<1x8xf32>
    %c0_27 = arith.constant 0 : index
    %c0_28 = arith.constant 0 : index
    %c0_29 = arith.constant 0 : index
    %66 = vector.load %arg9[%c0_27, %c0_28, %c0_29] : memref<1x1x8xf32, #tpu.memory_space<vmem>>, vector<1x1x8xf32>
    %67 = vector.shape_cast %66 : vector<1x1x8xf32> to vector<1x8xf32>
    %68 = vector.shape_cast %65 : vector<1x8xf32> to vector<1x1x8xf32>
    tpu.vector_store %arg9[%c0_27, %c0_28, %c0_29], %68 {strides = array<i32>} : memref<1x1x8xf32, #tpu.memory_space<vmem>>, vector<1x1x8xf32>,
    return
  }
  func.func @transform_0(%arg0: i32) -> (i32, i32) {
    %c0_i32 = arith.constant 0 : i32
    %c0_i32_0 = arith.constant 0 : i32
    return %arg0, %c0_i32 : i32, i32
  }
  func.func @transform_1(%arg0: i32) -> (i32, i32) {
    %c0_i32 = arith.constant 0 : i32
    %c0_i32_0 = arith.constant 0 : i32
    return %arg0, %c0_i32 : i32, i32
  }
  func.func @transform_2(%arg0: i32) -> (i32, i32) {
    %c0_i32 = arith.constant 0 : i32
    %c0_i32_0 = arith.constant 0 : i32
    return %arg0, %c0_i32 : i32, i32
  }
  func.func @transform_3(%arg0: i32) -> (i32, i32) {
    %c0_i32 = arith.constant 0 : i32
    %c0_i32_0 = arith.constant 0 : i32
    return %arg0, %c0_i32 : i32, i32
  }
  func.func @transform_4(%arg0: i32) -> (i32, i32) {
    %c0_i32 = arith.constant 0 : i32
    %c0_i32_0 = arith.constant 0 : i32
    return %arg0, %c0_i32 : i32, i32
  }
  func.func @transform_5(%arg0: i32) -> (i32, i32) {
    %c0_i32 = arith.constant 0 : i32
    %c0_i32_0 = arith.constant 0 : i32
    return %arg0, %c0_i32 : i32, i32
  }
  func.func @transform_6(%arg0: i32) -> (i32, i32) {
    %c0_i32 = arith.constant 0 : i32
    %c0_i32_0 = arith.constant 0 : i32
    %c0_i32_1 = arith.constant 0 : i32
    return %c0_i32, %c0_i32_0 : i32, i32
  }
  func.func @transform_7(%arg0: i32) -> (i32, i32) {
    %c0_i32 = arith.constant 0 : i32
    %c0_i32_0 = arith.constant 0 : i32
    %c0_i32_1 = arith.constant 0 : i32
    return %c0_i32, %c0_i32_0 : i32, i32
  }
  func.func @transform_8(%arg0: i32) -> (i32, i32, i32) {
    %c0_i32 = arith.constant 0 : i32
    %c0_i32_0 = arith.constant 0 : i32
    %c0_i32_1 = arith.constant 0 : i32
    return %arg0, %c0_i32, %c0_i32_0 : i32, i32, i32
  }
}

</mosaic_0001>

<llo_original>
// kernel: atth_forward.1
$region0: #{atth_forward.1}
  #allocation0 [shape = 'u32[]', space=smem, size = 0x4, offset = 0x4, fixed_abs, tag = 'smem constant byte address 0x4 - core index']
  #allocation1 [shape = 'u32[144,128]{1,0:T(1,128)}', space=vmem, size = 0x12000, scoped, tag = 'internal scratch']
  %s0 = inlined_call_operand.vmem [shape: bf16[8,32], index: 0, kind: input, shape index: {}]
  %s1 = inlined_call_operand.vmem [shape: bf16[8,32], index: 1, kind: input, shape index: {}]
  %s2 = inlined_call_operand.vmem [shape: bf16[8,32], index: 2, kind: input, shape index: {}]
  %s3 = inlined_call_operand.vmem [shape: bf16[8,32], index: 3, kind: input, shape index: {}]
  %s4 = inlined_call_operand.vmem [shape: bf16[8,32], index: 4, kind: input, shape index: {}]
  %s5 = inlined_call_operand.vmem [shape: bf16[8,32], index: 5, kind: input, shape index: {}]
  %s6 = inlined_call_operand.vmem [shape: bf16[64,32], index: 6, kind: input, shape index: {}]
  %s7 = inlined_call_operand.vmem [shape: f32[1,32], index: 7, kind: input, shape index: {}]
  %s8 = inlined_call_operand.vmem [shape: f32[1,1,8], index: 8, kind: output, shape index: {}]
  %s9 = sld [smem:[#allocation0]]
  $region42: #{atth_forward.1} parent=0
    _
  %s11 = ssub.s32 1, %s9
  %s12 = scalar_select 0, %s11, %s9
  // Predicated region
  $region2: #{atth_forward.1} parent=0 // pred_check
    _
  $region3: #{atth_forward.1} parent=0 // pred_check_branch
    %14 = sbr.rel (0) target = $region5
  $region4: #{atth_forward.1} parent=0 // pred_region
    _
  $region5: #{atth_forward.1} parent=0 // pred_fallthru
    _
  // Predicated region
  $region6: #{atth_forward.1} parent=0 // pred_check
    _
  $region7: #{atth_forward.1} parent=0 // pred_check_branch
    %16 = sbr.rel (0) target = $region9
  $region8: #{atth_forward.1} parent=0 // pred_region
    _
  $region9: #{atth_forward.1} parent=0 // pred_fallthru
    _
  // Predicated region
  $region10: #{atth_forward.1} parent=0 // pred_check
    _
  $region11: #{atth_forward.1} parent=0 // pred_check_branch
    %18 = sbr.rel (0) target = $region13
  $region12: #{atth_forward.1} parent=0 // pred_region
    _
  $region13: #{atth_forward.1} parent=0 // pred_fallthru
    _
  // Predicated region
  $region14: #{atth_forward.1} parent=0 // pred_check
    _
  $region15: #{atth_forward.1} parent=0 // pred_check_branch
    %20 = sbr.rel (0) target = $region17
  $region16: #{atth_forward.1} parent=0 // pred_region
    _
  $region17: #{atth_forward.1} parent=0 // pred_fallthru
    _
  // Predicated region
  $region18: #{atth_forward.1} parent=0 // pred_check
    _
  $region19: #{atth_forward.1} parent=0 // pred_check_branch
    %22 = sbr.rel (0) target = $region21
  $region20: #{atth_forward.1} parent=0 // pred_region
    _
  $region21: #{atth_forward.1} parent=0 // pred_fallthru
    _
  // Predicated region
  $region22: #{atth_forward.1} parent=0 // pred_check
    _
  $region23: #{atth_forward.1} parent=0 // pred_check_branch
    %24 = sbr.rel (0) target = $region25
  $region24: #{atth_forward.1} parent=0 // pred_region
    _
  $region25: #{atth_forward.1} parent=0 // pred_fallthru
    _
  // Predicated region
  $region26: #{atth_forward.1} parent=0 // pred_check
    _
  $region27: #{atth_forward.1} parent=0 // pred_check_branch
    %26 = sbr.rel (0) target = $region29
  $region28: #{atth_forward.1} parent=0 // pred_region
    _
  $region29: #{atth_forward.1} parent=0 // pred_fallthru
    _
  // Predicated region
  $region30: #{atth_forward.1} parent=0 // pred_check
    _
  $region31: #{atth_forward.1} parent=0 // pred_check_branch
    %28 = sbr.rel (0) target = $region33
  $region32: #{atth_forward.1} parent=0 // pred_region
    _
  $region33: #{atth_forward.1} parent=0 // pred_fallthru
    _
  %v30 = vld [vmem:[%s6] sm:$0xf]
  %v31 = vld [vmem:[%s6 + $0x4] sm:$0xf]
  %v32 = vld [vmem:[%s6 + $0x8] sm:$0xf]
  %v33 = vld [vmem:[%s6 + $0xc] sm:$0xf]
  %v34 = vld [vmem:[%s6 + $0x10] sm:$0xf]
  %v35 = vld [vmem:[%s6 + $0x14] sm:$0xf]
  %v36 = vld [vmem:[%s6 + $0x18] sm:$0xf]
  %v37 = vld [vmem:[%s6 + $0x1c] sm:$0xf]
  %v38 = vld [vmem:[%s7] sm:$0x1]
  %v39 = vld [vmem:[%s0] sm:$0xf]
  %v40 = vld [vmem:[%s1] sm:$0xf]
  %v41 = vld [vmem:[%s2] sm:$0xf]
  %v46 = vunpack.c.l.b16 %v30
  %v47 = vunpack.c.l.b16 %v31
  %v48 = vunpack.c.l.b16 %v32
  %v49 = vunpack.c.l.b16 %v33
  %v50 = vpack.c.b16 %v47, %v46
  %v51 = vpack.c.b16 %v49, %v48
  %vm54 = vcmask 261120
  %v56 = vsel %vm54, %v39, 0
  %58 = vmatprep.subr.bf16.mxu0 0
  %59 = vmatpush1.bf16.msra.mxu0 %v50
  %60 = vmatprep.subr.bf16.mxu0 0
  %61 = vmatpush1.bf16.msra.mxu0 %v51
  %62 = vmatprep.subr.bf16.mxu0 0
  %63 = vmatpush1.bf16.msra.mxu0 0
  %64 = vmatprep.subr.bf16.mxu0 0
  %65 = vmatpush1.bf16.msra.mxu0 0
  %66 = vmatprep.subr.bf16.mxu0 0
  %67 = vmatpush1.bf16.msra.mxu0 0
  %68 = vmatprep.subr.bf16.mxu0 0
  %69 = vmatpush1.bf16.msra.mxu0 0
  %70 = vmatprep.subr.bf16.mxu0 0
  %71 = vmatpush1.bf16.msra.mxu0 0
  %72 = vmatprep.subr.bf16.mxu0 0
  %73 = vmatpush1.bf16.msra.mxu0 0
  %74 = vmatprep.subr.bf16.mxu0 0
  %75 = vmatpush1.bf16.msra.mxu0 0
  %76 = vmatprep.subr.bf16.mxu0 0
  %77 = vmatpush1.bf16.msra.mxu0 0
  %78 = vmatprep.subr.bf16.mxu0 0
  %79 = vmatpush1.bf16.msra.mxu0 0
  %80 = vmatprep.subr.bf16.mxu0 0
  %81 = vmatpush1.bf16.msra.mxu0 0
  %82 = vmatprep.subr.bf16.mxu0 0
  %83 = vmatpush1.bf16.msra.mxu0 0
  %84 = vmatprep.subr.bf16.mxu0 0
  %85 = vmatpush1.bf16.msra.mxu0 0
  %86 = vmatprep.subr.bf16.mxu0 0
  %87 = vmatpush1.bf16.msra.mxu0 0
  %88 = vmatprep.subr.bf16.mxu0 0
  %89 = vmatpush1.bf16.msra.mxu0 0
  %90 = vmatprep.mubr.bf16.mxu0 0
  %91 = vmatmul.mubr.bf16.gmra.mrb[0].mxu0 %v56
  %v92 = vpop.f32.mrb[0].mxu0
  %v93 = vadd.f32 0.0, %v92
  %v94 = vpop.f32.mrb[0].mxu0
  %v95 = vpop.f32.mrb[0].mxu0
  %v96 = vpop.f32.mrb[0].mxu0
  %97 = vdwg.mxu0
  %v99 = vlaneseq
  %v100 = vshrl.u32 %v99, 7
  %v101 = vsub.s32 0, %v100
  %v102 = vrot.slane %v38, %v101
  %v104 = vadd.f32 %v102, %v93
  %v109 = vunpack.c.l.b16 %v34
  %v110 = vunpack.c.l.b16 %v35
  %v111 = vunpack.c.l.b16 %v36
  %v112 = vunpack.c.l.b16 %v37
  %v113 = vpack.c.b16 %v110, %v109
  %v114 = vpack.c.b16 %v112, %v111
  %v118 = vsel %vm54, %v40, 0
  %120 = vmatprep.subr.bf16.mxu0 0
  %121 = vmatpush1.bf16.msra.mxu0 %v113
  %122 = vmatprep.subr.bf16.mxu0 0
  %123 = vmatpush1.bf16.msra.mxu0 %v114
  %124 = vmatprep.subr.bf16.mxu0 0
  %125 = vmatpush1.bf16.msra.mxu0 0
  %126 = vmatprep.subr.bf16.mxu0 0
  %127 = vmatpush1.bf16.msra.mxu0 0
  %128 = vmatprep.subr.bf16.mxu0 0
  %129 = vmatpush1.bf16.msra.mxu0 0
  %130 = vmatprep.subr.bf16.mxu0 0
  %131 = vmatpush1.bf16.msra.mxu0 0
  %132 = vmatprep.subr.bf16.mxu0 0
  %133 = vmatpush1.bf16.msra.mxu0 0
  %134 = vmatprep.subr.bf16.mxu0 0
  %135 = vmatpush1.bf16.msra.mxu0 0
  %136 = vmatprep.subr.bf16.mxu0 0
  %137 = vmatpush1.bf16.msra.mxu0 0
  %138 = vmatprep.subr.bf16.mxu0 0
  %139 = vmatpush1.bf16.msra.mxu0 0
  %140 = vmatprep.subr.bf16.mxu0 0
  %141 = vmatpush1.bf16.msra.mxu0 0
  %142 = vmatprep.subr.bf16.mxu0 0
  %143 = vmatpush1.bf16.msra.mxu0 0
  %144 = vmatprep.subr.bf16.mxu0 0
  %145 = vmatpush1.bf16.msra.mxu0 0
  %146 = vmatprep.subr.bf16.mxu0 0
  %147 = vmatpush1.bf16.msra.mxu0 0
  %148 = vmatprep.subr.bf16.mxu0 0
  %149 = vmatpush1.bf16.msra.mxu0 0
  %150 = vmatprep.subr.bf16.mxu0 0
  %151 = vmatpush1.bf16.msra.mxu0 0
  %152 = vmatprep.mubr.bf16.mxu0 0
  %153 = vmatmul.mubr.bf16.gmra.mrb[0].mxu0 %v118
  %v154 = vpop.f32.mrb[0].mxu0
  %v155 = vadd.f32 0.0, %v154
  %v156 = vpop.f32.mrb[0].mxu0
  %v157 = vpop.f32.mrb[0].mxu0
  %v158 = vpop.f32.mrb[0].mxu0
  %159 = vdwg.mxu0
  %v160 = vadd.f32 %v104, %v155
  %v161 = vsel %vm54, %v160, -inf
  %162 = vmax.xlane.f32.xlu0 %v161
  %v163 = vpop.xlane.xlu0 %162
  %v164 = vsub.f32 %v160, %v163
  %v165 = vmul.f32 %v164, 1.442695
  %v166 = vpow.pop %v165
  %v167 = vsel %vm54, %v166, 0.0
  %168 = vadd.xlane.f32.xlu0 %v167
  %v169 = vpop.xlane.xlu0 %168
  %v170 = vrcp.pop %v169
  %v171 = vmul.f32 %v166, %v170
  %v172 = vunpack.c.l.bf16 %v39
  %v173 = vmul.f32 %v172, %v171
  %v174 = vunpack.c.l.bf16 %v40
  %v175 = vadd.f32 %v173, %v174
  %v176 = vunpack.c.l.bf16 %v41
  %v177 = vsub.f32 %v175, %v176
  %v178 = vmul.f32 %v177, %v177
  %179 = vxpose.xlu0.b32.start [1/16] %v178, 128
  %180 = vxpose.xlu0.b32.cont [2/16] 0.0, 128
  %181 = vxpose.xlu0.b32.cont [3/16] 0.0, 128
  %182 = vxpose.xlu0.b32.cont [4/16] 0.0, 128
  %183 = vxpose.xlu0.b32.cont [5/16] 0.0, 128
  %184 = vxpose.xlu0.b32.cont [6/16] 0.0, 128
  %185 = vxpose.xlu0.b32.cont [7/16] 0.0, 128
  %186 = vxpose.xlu0.b32.cont [8/16] 0.0, 128
  %187 = vxpose.xlu0.b32.cont [9/16] 0.0, 128
  %188 = vxpose.xlu0.b32.cont [10/16] 0.0, 128
  %189 = vxpose.xlu0.b32.cont [11/16] 0.0, 128
  %190 = vxpose.xlu0.b32.cont [12/16] 0.0, 128
  %191 = vxpose.xlu0.b32.cont [13/16] 0.0, 128
  %192 = vxpose.xlu0.b32.cont [14/16] 0.0, 128
  %193 = vxpose.xlu0.b32.cont [15/16] 0.0, 128
  %194 = vxpose.xlu0.b32.end [16/16] 0.0, 128
  %v195 = vpop.trf.xlu0
  %v196 = vpop.trf.xlu0
  %v197 = vpop.trf.xlu0
  %v198 = vpop.trf.xlu0
  %v199 = vpop.trf.xlu0
  %v200 = vpop.trf.xlu0
  %v201 = vpop.trf.xlu0
  %v202 = vpop.trf.xlu0
  %v203 = vpop.trf.xlu0
  %v204 = vpop.trf.xlu0
  %v205 = vpop.trf.xlu0
  %v206 = vpop.trf.xlu0
  %v207 = vpop.trf.xlu0
  %v208 = vpop.trf.xlu0
  %v209 = vpop.trf.xlu0
  %v210 = vpop.trf.xlu0
  %vm211 = vcmask 64512
  %v212 = vsel %vm211, %v195, 0.0
  %v213 = vsel %vm211, %v196, 0.0
  %v214 = vadd.f32 %v212, %v213
  %v215 = vsel %vm211, %v197, 0.0
  %v216 = vadd.f32 %v214, %v215
  %v217 = vsel %vm211, %v198, 0.0
  %v218 = vadd.f32 %v216, %v217
  %v219 = vrot.slane %v218, 4
  %v220 = vadd.f32 %v218, %v219
  %v221 = vrot.slane %v220, 2
  %v222 = vadd.f32 %v220, %v221
  %v223 = vrot.slane %v222, 1
  %v224 = vadd.f32 %v222, %v223
  %v225 = vrsqrt.pop %v224
  %v226 = vmul.f32 %v224, %v225
  %vm227 = vcmp.eq.f32.partialorder %v224, inf
  %v228 = vsel %vm227, %v224, %v226
  %vm229 = vcmp.eq.f32.partialorder %v224, 0.0
  %v230 = vand.u32 %v224, 2147483648
  %v231 = vsel %vm229, %v230, %v228
  %v232 = vld [vmem:[%s3] sm:$0xf]
  %v233 = vld [vmem:[%s4] sm:$0xf]
  %v234 = vld [vmem:[%s5] sm:$0xf]
  %v236 = vsel %vm54, %v232, 0
  %238 = vmatprep.subr.bf16.mxu0 0
  %239 = vmatpush1.bf16.msra.mxu0 %v50
  %240 = vmatprep.subr.bf16.mxu0 0
  %241 = vmatpush1.bf16.msra.mxu0 %v51
  %242 = vmatprep.subr.bf16.mxu0 0
  %243 = vmatpush1.bf16.msra.mxu0 0
  %244 = vmatprep.subr.bf16.mxu0 0
  %245 = vmatpush1.bf16.msra.mxu0 0
  %246 = vmatprep.subr.bf16.mxu0 0
  %247 = vmatpush1.bf16.msra.mxu0 0
  %248 = vmatprep.subr.bf16.mxu0 0
  %249 = vmatpush1.bf16.msra.mxu0 0
  %250 = vmatprep.subr.bf16.mxu0 0
  %251 = vmatpush1.bf16.msra.mxu0 0
  %252 = vmatprep.subr.bf16.mxu0 0
  %253 = vmatpush1.bf16.msra.mxu0 0
  %254 = vmatprep.subr.bf16.mxu0 0
  %255 = vmatpush1.bf16.msra.mxu0 0
  %256 = vmatprep.subr.bf16.mxu0 0
  %257 = vmatpush1.bf16.msra.mxu0 0
  %258 = vmatprep.subr.bf16.mxu0 0
  %259 = vmatpush1.bf16.msra.mxu0 0
  %260 = vmatprep.subr.bf16.mxu0 0
  %261 = vmatpush1.bf16.msra.mxu0 0
  %262 = vmatprep.subr.bf16.mxu0 0
  %263 = vmatpush1.bf16.msra.mxu0 0
  %264 = vmatprep.subr.bf16.mxu0 0
  %265 = vmatpush1.bf16.msra.mxu0 0
  %266 = vmatprep.subr.bf16.mxu0 0
  %267 = vmatpush1.bf16.msra.mxu0 0
  %268 = vmatprep.subr.bf16.mxu0 0
  %269 = vmatpush1.bf16.msra.mxu0 0
  %270 = vmatprep.mubr.bf16.mxu0 0
  %271 = vmatmul.mubr.bf16.gmra.mrb[0].mxu0 %v236
  %v272 = vpop.f32.mrb[0].mxu0
  %v273 = vadd.f32 0.0, %v272
  %v274 = vpop.f32.mrb[0].mxu0
  %v275 = vpop.f32.mrb[0].mxu0
  %v276 = vpop.f32.mrb[0].mxu0
  %277 = vdwg.mxu0
  %v278 = vadd.f32 %v102, %v273
  %v280 = vsel %vm54, %v233, 0
  %282 = vmatprep.subr.bf16.mxu0 0
  %283 = vmatpush1.bf16.msra.mxu0 %v113
  %284 = vmatprep.subr.bf16.mxu0 0
  %285 = vmatpush1.bf16.msra.mxu0 %v114
  %286 = vmatprep.subr.bf16.mxu0 0
  %287 = vmatpush1.bf16.msra.mxu0 0
  %288 = vmatprep.subr.bf16.mxu0 0
  %289 = vmatpush1.bf16.msra.mxu0 0
  %290 = vmatprep.subr.bf16.mxu0 0
  %291 = vmatpush1.bf16.msra.mxu0 0
  %292 = vmatprep.subr.bf16.mxu0 0
  %293 = vmatpush1.bf16.msra.mxu0 0
  %294 = vmatprep.subr.bf16.mxu0 0
  %295 = vmatpush1.bf16.msra.mxu0 0
  %296 = vmatprep.subr.bf16.mxu0 0
  %297 = vmatpush1.bf16.msra.mxu0 0
  %298 = vmatprep.subr.bf16.mxu0 0
  %299 = vmatpush1.bf16.msra.mxu0 0
  %300 = vmatprep.subr.bf16.mxu0 0
  %301 = vmatpush1.bf16.msra.mxu0 0
  %302 = vmatprep.subr.bf16.mxu0 0
  %303 = vmatpush1.bf16.msra.mxu0 0
  %304 = vmatprep.subr.bf16.mxu0 0
  %305 = vmatpush1.bf16.msra.mxu0 0
  %306 = vmatprep.subr.bf16.mxu0 0
  %307 = vmatpush1.bf16.msra.mxu0 0
  %308 = vmatprep.subr.bf16.mxu0 0
  %309 = vmatpush1.bf16.msra.mxu0 0
  %310 = vmatprep.subr.bf16.mxu0 0
  %311 = vmatpush1.bf16.msra.mxu0 0
  %312 = vmatprep.subr.bf16.mxu0 0
  %313 = vmatpush1.bf16.msra.mxu0 0
  %314 = vmatprep.mubr.bf16.mxu0 0
  %315 = vmatmul.mubr.bf16.gmra.mrb[0].mxu0 %v280
  %v316 = vpop.f32.mrb[0].mxu0
  %v317 = vadd.f32 0.0, %v316
  %v318 = vpop.f32.mrb[0].mxu0
  %v319 = vpop.f32.mrb[0].mxu0
  %v320 = vpop.f32.mrb[0].mxu0
  %321 = vdwg.mxu0
  %v322 = vadd.f32 %v278, %v317
  %v323 = vsel %vm54, %v322, -inf
  %324 = vmax.xlane.f32.xlu0 %v323
  %v325 = vpop.xlane.xlu0 %324
  %v326 = vsub.f32 %v322, %v325
  %v327 = vmul.f32 %v326, 1.442695
  %v328 = vpow.pop %v327
  %v329 = vsel %vm54, %v328, 0.0
  %330 = vadd.xlane.f32.xlu0 %v329
  %v331 = vpop.xlane.xlu0 %330
  %v332 = vrcp.pop %v331
  %v333 = vmul.f32 %v328, %v332
  %v334 = vunpack.c.l.bf16 %v232
  %v335 = vmul.f32 %v334, %v333
  %v336 = vunpack.c.l.bf16 %v233
  %v337 = vadd.f32 %v335, %v336
  %v338 = vunpack.c.l.bf16 %v234
  %v339 = vsub.f32 %v337, %v338
  %v340 = vmul.f32 %v339, %v339
  %341 = vxpose.xlu0.b32.start [1/16] %v340, 128
  %342 = vxpose.xlu0.b32.cont [2/16] 0.0, 128
  %343 = vxpose.xlu0.b32.cont [3/16] 0.0, 128
  %344 = vxpose.xlu0.b32.cont [4/16] 0.0, 128
  %345 = vxpose.xlu0.b32.cont [5/16] 0.0, 128
  %346 = vxpose.xlu0.b32.cont [6/16] 0.0, 128
  %347 = vxpose.xlu0.b32.cont [7/16] 0.0, 128
  %348 = vxpose.xlu0.b32.cont [8/16] 0.0, 128
  %349 = vxpose.xlu0.b32.cont [9/16] 0.0, 128
  %350 = vxpose.xlu0.b32.cont [10/16] 0.0, 128
  %351 = vxpose.xlu0.b32.cont [11/16] 0.0, 128
  %352 = vxpose.xlu0.b32.cont [12/16] 0.0, 128
  %353 = vxpose.xlu0.b32.cont [13/16] 0.0, 128
  %354 = vxpose.xlu0.b32.cont [14/16] 0.0, 128
  %355 = vxpose.xlu0.b32.cont [15/16] 0.0, 128
  %356 = vxpose.xlu0.b32.end [16/16] 0.0, 128
  %v357 = vpop.trf.xlu0
  %v358 = vpop.trf.xlu0
  %v359 = vpop.trf.xlu0
  %v360 = vpop.trf.xlu0
  %v361 = vpop.trf.xlu0
  %v362 = vpop.trf.xlu0
  %v363 = vpop.trf.xlu0
  %v364 = vpop.trf.xlu0
  %v365 = vpop.trf.xlu0
  %v366 = vpop.trf.xlu0
  %v367 = vpop.trf.xlu0
  %v368 = vpop.trf.xlu0
  %v369 = vpop.trf.xlu0
  %v370 = vpop.trf.xlu0
  %v371 = vpop.trf.xlu0
  %v372 = vpop.trf.xlu0
  %v373 = vsel %vm211, %v357, 0.0
  %v374 = vsel %vm211, %v358, 0.0
  %v375 = vadd.f32 %v373, %v374
  %v376 = vsel %vm211, %v359, 0.0
  %v377 = vadd.f32 %v375, %v376
  %v378 = vsel %vm211, %v360, 0.0
  %v379 = vadd.f32 %v377, %v378
  %v380 = vrot.slane %v379, 4
  %v381 = vadd.f32 %v379, %v380
  %v382 = vrot.slane %v381, 2
  %v383 = vadd.f32 %v381, %v382
  %v384 = vrot.slane %v383, 1
  %v385 = vadd.f32 %v383, %v384
  %v386 = vrsqrt.pop %v385
  %v387 = vmul.f32 %v385, %v386
  %vm388 = vcmp.eq.f32.partialorder %v385, inf
  %v389 = vsel %vm388, %v385, %v387
  %vm390 = vcmp.eq.f32.partialorder %v385, 0.0
  %v391 = vand.u32 %v385, 2147483648
  %v392 = vsel %vm390, %v391, %v389
  %v393 = vsub.f32 %v231, %v392
  %v394 = vadd.f32 %v393, 1.0
  %v395 = vmax.f32 %v394, 0.0
  %vm396 = vcmask 57344
  %397 = vst.msk [vmem:[%s8] sm:$0x1] %vm396, %v395
  // Predicated region
  $region34: #{atth_forward.1} parent=0 // pred_check
    _
  $region35: #{atth_forward.1} parent=0 // pred_check_branch
    %399 = sbr.rel (0) target = $region37
  $region36: #{atth_forward.1} parent=0 // pred_region
    _
  $region37: #{atth_forward.1} parent=0 // pred_fallthru
    _
  // Predicated region
  $region38: #{atth_forward.1} parent=0 // pred_check
    _
  $region39: #{atth_forward.1} parent=0 // pred_check_branch
    %401 = sbr.rel (0) target = $region41
  $region40: #{atth_forward.1} parent=0 // pred_region
    _
  $region41: #{atth_forward.1} parent=0 // pred_fallthru
    _

</llo_original>
